<compile_context>
chip_gen: v6e
topology: v6e:2x2x1
jax: 0.10.0
libtpu: 0.0.40
codegen_flags: <defaults>
</compile_context>

<pallas_src>
import functools

import jax
import jax.numpy as jnp
from jax.experimental import pallas as pl
from jax.experimental.pallas import tpu as pltpu

LANE = 128   # lane width
SUBL = 8     # f32 sublane count: one (8, 128) vreg


def _round_up(x, m):
    return ((x + m - 1) // m) * m


def _tpu_tiling():
    """(max rows per tile, max partitions) for the local TPU generation."""
    kind = ""
    try:
        kind = jax.devices()[0].device_kind.lower()
    except Exception:
        pass
    if "v7" in kind:                    # 2 TCs, ~3.2 TB/s/TC -> big tiles + split
        return 8192, 2
    if "v6" in kind:                    # 1 TC, 32 MiB scoped-VMEM default
        return 8192, 1
    if "v5p" in kind:                   # megacore: 2 TCs
        return 8192, 2
    if "v5" in kind:                    # v5e / v5 lite: 16 MiB scoped-VMEM default
        return 4096, 1
    if "v4" in kind or "v3" in kind:    # megacore: 2 TCs
        return 4096, 2
    return 4096, 1


def _masked_mse_kernel(pred_ref, true_ref, sum_ref, cnt_ref, acc_s, acc_c,
                       *, tr, n_rows, n_tiles, inner):
    o = pl.program_id(0)   # partition ("parallel": one per TensorCore)
    j = pl.program_id(1)   # row-tile within partition ("arbitrary": reduction)

    @pl.when(j == 0)
    def _():
        acc_s[...] = jnp.zeros_like(acc_s)
        acc_c[...] = jnp.zeros_like(acc_c)

    p = pred_ref[...].astype(jnp.float32)
    t = true_ref[...].astype(jnp.float32)
    nan_ok = jnp.logical_not(jnp.isnan(t))

    def accumulate(valid):
        diff = jnp.where(valid, p - t, 0.0)
        sq = (diff * diff).reshape(tr // SUBL, SUBL, LANE)
        cnt = valid.astype(jnp.int32).reshape(tr // SUBL, SUBL, LANE)
        # Fold the whole tile into one vreg-sized accumulator: same number of
        # VALU adds as a full-tile accumulator, but no extra (tr,128) VMEM
        # read-modify-write on the narrow vld/vst slots.
        acc_s[...] += jnp.sum(sq, axis=0)
        acc_c[...] += jnp.sum(cnt, axis=0)

    tile_idx = o * inner + j
    # Edge tile (possibly partial) or a clamped duplicate iteration.
    is_edge = tile_idx >= n_tiles - 1

    @pl.when(jnp.logical_not(is_edge))
    def _():
        # Fast path: interior tiles are fully in-bounds -> NaN mask only.
        accumulate(nan_ok)

    @pl.when(is_edge)
    def _():
        # Edge path: additionally mask rows past n_rows (OOB rows of the
        # partial edge block and whole clamped-duplicate tiles are garbage).
        rows = tile_idx * tr + jax.lax.broadcasted_iota(jnp.int32, (tr, LANE), 0)
        accumulate(jnp.logical_and(rows < n_rows, nan_ok))

    @pl.when(j == pl.num_programs(1) - 1)
    def _():
        # Lane-dense (8,128) partial per partition (unmasked vst); the tiny
        # cross-lane combine + divide happens in the wrapper.
        sum_ref[...] = acc_s[...]
        cnt_ref[...] = acc_c[...]


def masked_mse_loss(y_pred, y_true):
    """mean((y_pred - y_true)**2) over entries where y_true is not NaN."""
    if y_pred.dtype not in (jnp.float32, jnp.bfloat16, jnp.float16):
        y_pred = y_pred.astype(jnp.float32)
    if y_true.dtype not in (jnp.float32, jnp.bfloat16, jnp.float16):
        y_true = y_true.astype(jnp.float32)

    pred = y_pred.reshape(-1)
    true = y_true.reshape(-1)
    n = pred.shape[0]
    if n == 0:
        return jnp.float32(jnp.nan)   # matches torch mse_loss on empty input

    # Lane-align only when needed (<= 127 extra elements); padded y_true is
    # NaN so padded lanes are excluded by the mask.
    rem = n % LANE
    if rem:
        pad = LANE - rem
        pred = jnp.pad(pred, (0, pad))
        true = jnp.pad(true, (0, pad), constant_values=jnp.nan)

    n_rows = pred.shape[0] // LANE
    pred2 = pred.reshape(n_rows, LANE)
    true2 = true.reshape(n_rows, LANE)

    # Tiny inputs: pad to 16 rows (negligible copy) so the row tile is a
    # multiple of 16 and never exceeds the array extent.
    if n_rows < 16:
        pad_rows = 16 - n_rows
        pred2 = jnp.pad(pred2, ((0, pad_rows), (0, 0)))
        true2 = jnp.pad(true2, ((0, pad_rows), (0, 0)), constant_values=jnp.nan)
        n_rows = 16

    max_tr, n_part_max = _tpu_tiling()
    tr = min(max_tr, (n_rows // 16) * 16)       # rows per tile, multiple of 16
    n_tiles = pl.cdiv(n_rows, tr)
    n_part = n_part_max if n_tiles >= 2 else 1  # split only on multi-TC chips
    inner = pl.cdiv(n_tiles, n_part)

    def in_map(o, j):
        # Clamp so duplicate iterations (when n_tiles % n_part != 0) re-read a
        # valid tile; their rows are fully masked out by the edge path.
        return (jnp.minimum(o * inner + j, n_tiles - 1), 0)

    # Double-buffered input footprint + headroom (acc scratch is ~8 KiB).
    in_bytes = 2 * tr * LANE * (pred2.dtype.itemsize + true2.dtype.itemsize)
    vmem_limit = int(in_bytes) + (8 << 20)

    kernel = functools.partial(_masked_mse_kernel, tr=tr, n_rows=n_rows,
                               n_tiles=n_tiles, inner=inner)

    s_out, c_out = pl.pallas_call(
        kernel,
        out_shape=(
            jax.ShapeDtypeStruct((n_part * SUBL, LANE), jnp.float32),
            jax.ShapeDtypeStruct((n_part * SUBL, LANE), jnp.int32),
        ),
        grid=(n_part, inner),
        in_specs=[
            pl.BlockSpec((tr, LANE), in_map),
            pl.BlockSpec((tr, LANE), in_map),
        ],
        out_specs=(
            pl.BlockSpec((SUBL, LANE), lambda o, j: (o, 0)),
            pl.BlockSpec((SUBL, LANE), lambda o, j: (o, 0)),
        ),
        scratch_shapes=[
            pltpu.VMEM((SUBL, LANE), jnp.float32),
            pltpu.VMEM((SUBL, LANE), jnp.int32),
        ],
        compiler_params=pltpu.CompilerParams(
            dimension_semantics=("parallel", "arbitrary"),
            vmem_limit_bytes=vmem_limit,
        ),
    )(pred2, true2)

    # Tiny final combine: f32 sum of squares, exact int32 count.
    return jnp.sum(s_out) / jnp.sum(c_out)


def _check(shape, keys):
    k1, k2, k3 = keys
    y_pred = jax.random.normal(k1, shape, dtype=jnp.float32)
    y_true = jax.random.normal(k2, shape, dtype=jnp.float32)
    nan_mask = jax.random.uniform(k3, shape) < 0.3   # ~30% NaN -> exercise mask
    y_true = jnp.where(nan_mask, jnp.nan, y_true)

    loss = jax.block_until_ready(jax.jit(masked_mse_loss)(y_pred, y_true))

    # Pure-JAX reference of the masked MSE semantics.
    valid = ~jnp.isnan(y_true)
    ref = jnp.sum(jnp.where(valid, (y_pred - y_true) ** 2, 0.0)) / jnp.sum(valid)
    assert jnp.allclose(loss, ref, rtol=1e-5, atol=1e-6), (shape, loss, ref)


if __name__ == "__main__":
    key = jax.random.PRNGKey(0)
    keys = jax.random.split(key, 6)

    # Small NCHW-like shape consistent with the module.
    _check((2, 4, 16, 16), keys[:3])
    # Unaligned shape: exercises lane padding + the masked edge-tile path.
    _check((3, 5, 17, 19), keys[3:])

    print("KERNEL_OK")
</pallas_src>

<mosaic_0001>
module attributes {stable_mosaic.version = 11 : i64} {
  func.func @_masked_mse_kernel(%arg0: i32, %arg1: i32, %arg2: memref<16x128xf32, #tpu.memory_space<vmem>>, %arg3: memref<16x128xf32, #tpu.memory_space<vmem>>, %arg4: memref<8x128xf32, #tpu.memory_space<vmem>>, %arg5: memref<8x128xi32, #tpu.memory_space<vmem>>, %arg6: memref<8x128xf32, #tpu.memory_space<vmem>>, %arg7: memref<8x128xi32, #tpu.memory_space<vmem>>) attributes {dimension_semantics = [#tpu.dimension_semantics<parallel>, #tpu.dimension_semantics<arbitrary>], iteration_bounds = array<i64: 1, 1>, scalar_prefetch = 0 : i64, scratch_operands = 2 : i64, tpu.core_type = #tpu.core_type<tc>, window_params = [{transform_indices = @transform_0, window_bounds = array<i64: 16, 128>}, {transform_indices = @transform_1, window_bounds = array<i64: 16, 128>}, {transform_indices = @transform_2, window_bounds = array<i64: 8, 128>}, {transform_indices = @transform_3, window_bounds = array<i64: 8, 128>}]} {
    %c0_i32 = arith.constant 0 : i32
    %0 = arith.cmpi eq, %arg1, %c0_i32 : i32
    %1 = arith.extui %0 : i1 to i32
    %c0_i32_0 = arith.constant 0 : i32
    %2 = arith.cmpi ne, %1, %c0_i32_0 : i32
    scf.if %2 {
      %cst_9 = arith.constant 0.000000e+00 : f32
      %18 = vector.broadcast %cst_9 : f32 to vector<8x128xf32>
      %c0_10 = arith.constant 0 : index
      %c0_11 = arith.constant 0 : index
      %19 = vector.load %arg6[%c0_10, %c0_11] : memref<8x128xf32, #tpu.memory_space<vmem>>, vector<8x128xf32>
      tpu.vector_store %arg6[%c0_10, %c0_11], %18 {strides = array<i32>} : memref<8x128xf32, #tpu.memory_space<vmem>>, vector<8x128xf32>,
      %c0_i32_12 = arith.constant 0 : i32
      %20 = vector.broadcast %c0_i32_12 : i32 to vector<8x128xi32>
      %c0_13 = arith.constant 0 : index
      %c0_14 = arith.constant 0 : index
      %21 = vector.load %arg7[%c0_13, %c0_14] : memref<8x128xi32, #tpu.memory_space<vmem>>, vector<8x128xi32>
      tpu.vector_store %arg7[%c0_13, %c0_14], %20 {strides = array<i32>} : memref<8x128xi32, #tpu.memory_space<vmem>>, vector<8x128xi32>,
    } else {
    }
    %c0 = arith.constant 0 : index
    %c0_1 = arith.constant 0 : index
    %3 = vector.load %arg2[%c0, %c0_1] : memref<16x128xf32, #tpu.memory_space<vmem>>, vector<16x128xf32>
    %c0_2 = arith.constant 0 : index
    %c0_3 = arith.constant 0 : index
    %4 = vector.load %arg3[%c0_2, %c0_3] : memref<16x128xf32, #tpu.memory_space<vmem>>, vector<16x128xf32>
    %5 = arith.cmpf one, %4, %4 : vector<16x128xf32>
    %cst = arith.constant dense<true> : vector<16x128xi1>
    %6 = arith.xori %5, %cst : vector<16x128xi1>
    %c1_i32 = arith.constant 1 : i32
    %7 = arith.muli %arg0, %c1_i32 : i32
    %8 = arith.addi %7, %arg1 : i32
    %c0_i32_4 = arith.constant 0 : i32
    %9 = arith.cmpi sge, %8, %c0_i32_4 : i32
    %true = arith.constant true
    %10 = arith.xori %9, %true : i1
    %11 = arith.extui %10 : i1 to i32
    %c0_i32_5 = arith.constant 0 : i32
    %12 = arith.cmpi ne, %11, %c0_i32_5 : i32
    scf.if %12 {
      %18 = arith.subf %3, %4 : vector<16x128xf32>
      %cst_9 = arith.constant 0.000000e+00 : f32
      %19 = vector.broadcast %cst_9 : f32 to vector<16x128xf32>
      %20 = arith.select %6, %18, %19 : vector<16x128xi1>, vector<16x128xf32>
      %21 = arith.mulf %20, %20 : vector<16x128xf32>
      %22 = vector.shape_cast %21 : vector<16x128xf32> to vector<2x8x128xf32>
      %23 = arith.extui %6 : vector<16x128xi1> to vector<16x128xi32>
      %24 = vector.shape_cast %23 : vector<16x128xi32> to vector<2x8x128xi32>
      %c0_10 = arith.constant 0 : index
      %c0_11 = arith.constant 0 : index
      %25 = vector.load %arg6[%c0_10, %c0_11] : memref<8x128xf32, #tpu.memory_space<vmem>>, vector<8x128xf32>
      %cst_12 = arith.constant dense<0.000000e+00> : vector<8x128xf32>
      %26 = vector.multi_reduction <add>, %22, %cst_12 [0] : vector<2x8x128xf32> to vector<8x128xf32>
      %27 = arith.addf %25, %26 : vector<8x128xf32>
      %c0_13 = arith.constant 0 : index
      %c0_14 = arith.constant 0 : index
      %28 = vector.load %arg6[%c0_13, %c0_14] : memref<8x128xf32, #tpu.memory_space<vmem>>, vector<8x128xf32>
      tpu.vector_store %arg6[%c0_13, %c0_14], %27 {strides = array<i32>} : memref<8x128xf32, #tpu.memory_space<vmem>>, vector<8x128xf32>,
      %c0_15 = arith.constant 0 : index
      %c0_16 = arith.constant 0 : index
      %29 = vector.load %arg7[%c0_15, %c0_16] : memref<8x128xi32, #tpu.memory_space<vmem>>, vector<8x128xi32>
      %cst_17 = arith.constant dense<0> : vector<8x128xi32>
      %30 = vector.multi_reduction <add>, %24, %cst_17 [0] : vector<2x8x128xi32> to vector<8x128xi32>
      %31 = arith.addi %29, %30 : vector<8x128xi32>
      %c0_18 = arith.constant 0 : index
      %c0_19 = arith.constant 0 : index
      %32 = vector.load %arg7[%c0_18, %c0_19] : memref<8x128xi32, #tpu.memory_space<vmem>>, vector<8x128xi32>
      tpu.vector_store %arg7[%c0_18, %c0_19], %31 {strides = array<i32>} : memref<8x128xi32, #tpu.memory_space<vmem>>, vector<8x128xi32>,
    } else {
    }
    %13 = arith.extui %9 : i1 to i32
    %c0_i32_6 = arith.constant 0 : i32
    %14 = arith.cmpi ne, %13, %c0_i32_6 : i32
    scf.if %14 {
      %c16_i32 = arith.constant 16 : i32
      %18 = arith.muli %8, %c16_i32 : i32
      %19 = tpu.iota {dimensions = array<i32: 0>} : vector<16x128xi32>
      %20 = vector.broadcast %18 : i32 to vector<16x128xi32>
      %21 = arith.addi %20, %19 : vector<16x128xi32>
      %c16_i32_9 = arith.constant 16 : i32
      %22 = vector.broadcast %c16_i32_9 : i32 to vector<16x128xi32>
      %23 = arith.cmpi slt, %21, %22 : vector<16x128xi32>
      %24 = arith.andi %23, %6 : vector<16x128xi1>
      %25 = arith.subf %3, %4 : vector<16x128xf32>
      %cst_10 = arith.constant 0.000000e+00 : f32
      %26 = vector.broadcast %cst_10 : f32 to vector<16x128xf32>
      %27 = arith.select %24, %25, %26 : vector<16x128xi1>, vector<16x128xf32>
      %28 = arith.mulf %27, %27 : vector<16x128xf32>
      %29 = vector.shape_cast %28 : vector<16x128xf32> to vector<2x8x128xf32>
      %30 = arith.extui %24 : vector<16x128xi1> to vector<16x128xi32>
      %31 = vector.shape_cast %30 : vector<16x128xi32> to vector<2x8x128xi32>
      %c0_11 = arith.constant 0 : index
      %c0_12 = arith.constant 0 : index
      %32 = vector.load %arg6[%c0_11, %c0_12] : memref<8x128xf32, #tpu.memory_space<vmem>>, vector<8x128xf32>
      %cst_13 = arith.constant dense<0.000000e+00> : vector<8x128xf32>
      %33 = vector.multi_reduction <add>, %29, %cst_13 [0] : vector<2x8x128xf32> to vector<8x128xf32>
      %34 = arith.addf %32, %33 : vector<8x128xf32>
      %c0_14 = arith.constant 0 : index
      %c0_15 = arith.constant 0 : index
      %35 = vector.load %arg6[%c0_14, %c0_15] : memref<8x128xf32, #tpu.memory_space<vmem>>, vector<8x128xf32>
      tpu.vector_store %arg6[%c0_14, %c0_15], %34 {strides = array<i32>} : memref<8x128xf32, #tpu.memory_space<vmem>>, vector<8x128xf32>,
      %c0_16 = arith.constant 0 : index
      %c0_17 = arith.constant 0 : index
      %36 = vector.load %arg7[%c0_16, %c0_17] : memref<8x128xi32, #tpu.memory_space<vmem>>, vector<8x128xi32>
      %cst_18 = arith.constant dense<0> : vector<8x128xi32>
      %37 = vector.multi_reduction <add>, %31, %cst_18 [0] : vector<2x8x128xi32> to vector<8x128xi32>
      %38 = arith.addi %36, %37 : vector<8x128xi32>
      %c0_19 = arith.constant 0 : index
      %c0_20 = arith.constant 0 : index
      %39 = vector.load %arg7[%c0_19, %c0_20] : memref<8x128xi32, #tpu.memory_space<vmem>>, vector<8x128xi32>
      tpu.vector_store %arg7[%c0_19, %c0_20], %38 {strides = array<i32>} : memref<8x128xi32, #tpu.memory_space<vmem>>, vector<8x128xi32>,
    } else {
    }
    %c0_i32_7 = arith.constant 0 : i32
    %15 = arith.cmpi eq, %arg1, %c0_i32_7 : i32
    %16 = arith.extui %15 : i1 to i32
    %c0_i32_8 = arith.constant 0 : i32
    %17 = arith.cmpi ne, %16, %c0_i32_8 : i32
    scf.if %17 {
      %c0_9 = arith.constant 0 : index
      %c0_10 = arith.constant 0 : index
      %18 = vector.load %arg6[%c0_9, %c0_10] : memref<8x128xf32, #tpu.memory_space<vmem>>, vector<8x128xf32>
      %c0_11 = arith.constant 0 : index
      %c0_12 = arith.constant 0 : index
      %19 = vector.load %arg4[%c0_11, %c0_12] : memref<8x128xf32, #tpu.memory_space<vmem>>, vector<8x128xf32>
      tpu.vector_store %arg4[%c0_11, %c0_12], %18 {strides = array<i32>} : memref<8x128xf32, #tpu.memory_space<vmem>>, vector<8x128xf32>,
      %c0_13 = arith.constant 0 : index
      %c0_14 = arith.constant 0 : index
      %20 = vector.load %arg7[%c0_13, %c0_14] : memref<8x128xi32, #tpu.memory_space<vmem>>, vector<8x128xi32>
      %c0_15 = arith.constant 0 : index
      %c0_16 = arith.constant 0 : index
      %21 = vector.load %arg5[%c0_15, %c0_16] : memref<8x128xi32, #tpu.memory_space<vmem>>, vector<8x128xi32>
      tpu.vector_store %arg5[%c0_15, %c0_16], %20 {strides = array<i32>} : memref<8x128xi32, #tpu.memory_space<vmem>>, vector<8x128xi32>,
    } else {
    }
    return
  }
  func.func @transform_0(%arg0: i32, %arg1: i32) -> (i32, i32) {
    %c1_i32 = arith.constant 1 : i32
    %0 = arith.muli %arg0, %c1_i32 : i32
    %1 = arith.addi %0, %arg1 : i32
    %c0_i32 = arith.constant 0 : i32
    %2 = arith.minsi %1, %c0_i32 : i32
    %c0_i32_0 = arith.constant 0 : i32
    %c0_i32_1 = arith.constant 0 : i32
    return %2, %c0_i32_0 : i32, i32
  }
  func.func @transform_1(%arg0: i32, %arg1: i32) -> (i32, i32) {
    %c1_i32 = arith.constant 1 : i32
    %0 = arith.muli %arg0, %c1_i32 : i32
    %1 = arith.addi %0, %arg1 : i32
    %c0_i32 = arith.constant 0 : i32
    %2 = arith.minsi %1, %c0_i32 : i32
    %c0_i32_0 = arith.constant 0 : i32
    %c0_i32_1 = arith.constant 0 : i32
    return %2, %c0_i32_0 : i32, i32
  }
  func.func @transform_2(%arg0: i32, %arg1: i32) -> (i32, i32) {
    %c0_i32 = arith.constant 0 : i32
    %c0_i32_0 = arith.constant 0 : i32
    return %arg0, %c0_i32 : i32, i32
  }
  func.func @transform_3(%arg0: i32, %arg1: i32) -> (i32, i32) {
    %c0_i32 = arith.constant 0 : i32
    %c0_i32_0 = arith.constant 0 : i32
    return %arg0, %c0_i32 : i32, i32
  }
}

</mosaic_0001>

<llo_original>
// kernel: masked_mse_loss.1
$region0: #{masked_mse_loss.1}
  #allocation0 [shape = 'u32[]', space=smem, size = 0x4, offset = 0x4, fixed_abs, tag = 'smem constant byte address 0x4 - core index']
  #allocation1 [shape = 'u32[144,128]{1,0:T(1,128)}', space=vmem, size = 0x12000, scoped, tag = 'internal scratch']
  #allocation2 [shape = 'f32[8,128]{1,0:T(8,128)}', space=vmem, size = 0x1000, scoped, tag = 'scratch operand']
  #allocation3 [shape = 's32[8,128]{1,0:T(8,128)}', space=vmem, size = 0x1000, scoped, tag = 'scratch operand']
  %s0 = inlined_call_operand.vmem [shape: f32[16,128], index: 0, kind: input, shape index: {}]
  %s1 = inlined_call_operand.vmem [shape: f32[16,128], index: 1, kind: input, shape index: {}]
  %s2 = inlined_call_operand.vmem [shape: f32[8,128], index: 2, kind: output, shape index: {0}]
  %s3 = inlined_call_operand.vmem [shape: s32[8,128], index: 3, kind: output, shape index: {1}]
  %4 = xla_tuple %s2, %s3
  %s5 = sld [smem:[#allocation0]]
  $region42: #{masked_mse_loss.1} parent=0
    _
  %s7 = ssub.s32 1, %s5
  %s8 = scalar_select 0, %s7, %s5
  // Predicated region
  $region2: #{masked_mse_loss.1} parent=0 // pred_check
    _
  $region3: #{masked_mse_loss.1} parent=0 // pred_check_branch
    %10 = sbr.rel (0) target = $region5
  $region4: #{masked_mse_loss.1} parent=0 // pred_region
    %s11 = sadd.s32 0, 0
    %p12 = scmp.lt.s32.totalorder %s11, 0
    %s13 = scalar_select %p12, %s11, 0
    %s14 = smul.u32 2, %s13
    %p15 = scmp.lt.s32.totalorder %s14, 1
    %s16 = scalar_select %p15, %s14, 1
    %s17 = smul.addr %s16, 8
    %s18 = scalar_lea.vmem %s0, %s17
    %s19 = sadd.s32 0, 0
    %p20 = scmp.lt.s32.totalorder %s19, 0
    %s21 = scalar_select %p20, %s19, 0
    %s22 = smul.u32 2, %s21
  $region5: #{masked_mse_loss.1} parent=0 // pred_fallthru
    _
  // Predicated region
  $region6: #{masked_mse_loss.1} parent=0 // pred_check
    _
  $region7: #{masked_mse_loss.1} parent=0 // pred_check_branch
    %24 = sbr.rel (0) target = $region9
  $region8: #{masked_mse_loss.1} parent=0 // pred_region
    %s25 = sadd.s32 0, 0
    %p26 = scmp.lt.s32.totalorder %s25, 0
    %s27 = scalar_select %p26, %s25, 0
    %s28 = smul.u32 2, %s27
    %p29 = scmp.lt.s32.totalorder %s28, 1
    %s30 = scalar_select %p29, %s28, 1
    %s31 = smul.addr %s30, 8
    %s32 = scalar_lea.vmem %s1, %s31
    %s33 = sadd.s32 0, 0
    %p34 = scmp.lt.s32.totalorder %s33, 0
    %s35 = scalar_select %p34, %s33, 0
    %s36 = smul.u32 2, %s35
  $region9: #{masked_mse_loss.1} parent=0 // pred_fallthru
    _
  %s37 = sadd.s32 0, 0
  %p38 = scmp.lt.s32.totalorder %s37, 0
  %s39 = scalar_select %p38, %s37, 0
  %s40 = smul.u32 2, %s39
  %p41 = scmp.lt.s32.totalorder %s40, 1
  %s42 = scalar_select %p41, %s40, 1
  %s43 = smul.addr %s42, 8
  %s44 = scalar_lea.vmem %s0, %s43
  %s45 = sadd.s32 0, 0
  %p46 = scmp.lt.s32.totalorder %s45, 0
  %s47 = scalar_select %p46, %s45, 0
  %s48 = smul.u32 2, %s47
  %p49 = scmp.lt.s32.totalorder %s48, 1
  %s50 = scalar_select %p49, %s48, 1
  %s51 = smul.addr %s50, 8
  %s52 = scalar_lea.vmem %s1, %s51
  %s53 = sadd.s32 0, 0
  %p54 = scmp.lt.s32.totalorder %s53, 0
  %s55 = scalar_select %p54, %s53, 0
  %s56 = smul.u32 2, %s55
  %p57 = scmp.lt.s32.totalorder %s56, 1
  %s58 = scalar_select %p57, %s56, 1
  %s59 = smul.addr %s58, 8
  %s60 = scalar_lea.vmem %s0, %s59
  %s61 = sadd.s32 0, 0
  %p62 = scmp.lt.s32.totalorder %s61, 0
  %s63 = scalar_select %p62, %s61, 0
  %s64 = smul.u32 2, %s63
  %s65 = sadd.s32 0, 0
  %p66 = scmp.lt.s32.totalorder %s65, 0
  %s67 = scalar_select %p66, %s65, 0
  %s68 = smul.u32 2, %s67
  %p69 = scmp.lt.s32.totalorder %s68, 1
  %s70 = scalar_select %p69, %s68, 1
  %s71 = smul.addr %s70, 8
  %s72 = scalar_lea.vmem %s1, %s71
  %s73 = sadd.s32 0, 0
  %p74 = scmp.lt.s32.totalorder %s73, 0
  %s75 = scalar_select %p74, %s73, 0
  %s76 = smul.u32 2, %s75
  %p77 = scmp.eq.s32.totalorder 0, 0
  // Predicated region
  $region10: #{masked_mse_loss.1} parent=0 // pred_check
    %p78 = pneg %p77
  $region11: #{masked_mse_loss.1} parent=0 // pred_check_branch
    %80 = sbr.rel (%p78) target = $region13
  $region12: #{masked_mse_loss.1} parent=0 // pred_region
    %81 = vst [vmem:[#allocation2] sm:$0xff] 0.0
    %82 = vst [vmem:[#allocation3] sm:$0xff] 0
  $region13: #{masked_mse_loss.1} parent=0 // pred_fallthru
    _
  %v83 = vld [vmem:[%s60] sm:$0xff]
  %v84 = vld [vmem:[%s60 + $0x8] sm:$0xff]
  %v85 = vld [vmem:[%s72] sm:$0xff]
  %v86 = vld [vmem:[%s72 + $0x8] sm:$0xff]
  %vm87 = vcmp.ne.f32.partialorder %v85, %v85
  %vm88 = vcmp.ne.f32.partialorder %v86, %v86
  %vm89 = vmxor %vm87, 1
  %vm90 = vmxor %vm88, 1
  %s91 = sadd.s32 0, 0
  %p92 = scmp.ge.s32.totalorder %s91, 0
  %p93 = scmp.lt.s32.totalorder %s91, 0
  // Predicated region
  $region14: #{masked_mse_loss.1} parent=0 // pred_check
    %p94 = pneg %p93
  $region15: #{masked_mse_loss.1} parent=0 // pred_check_branch
    %96 = sbr.rel (%p94) target = $region17
  $region16: #{masked_mse_loss.1} parent=0 // pred_region
    %v97 = vsub.f32 %v83, %v85
    %v98 = vsub.f32 %v84, %v86
    %v99 = vsel %vm89, %v97, 0.0
    %v100 = vsel %vm90, %v98, 0.0
    %v101 = vmul.f32 %v99, %v99
    %v102 = vmul.f32 %v100, %v100
    %v103 = vsel %vm89, 1, 0
    %v104 = vsel %vm90, 1, 0
    %v105 = vld [vmem:[#allocation2] sm:$0xff]
    %v106 = vadd.f32 %v101, %v102
    %v107 = vadd.f32 %v105, %v106
    %108 = vst [vmem:[#allocation2] sm:$0xff] %v107
    %v109 = vld [vmem:[#allocation3] sm:$0xff]
    %v110 = vadd.s32 %v103, %v104
    %v111 = vadd.s32 %v109, %v110
    %112 = vst [vmem:[#allocation3] sm:$0xff] %v111
  $region17: #{masked_mse_loss.1} parent=0 // pred_fallthru
    _
  // Predicated region
  $region18: #{masked_mse_loss.1} parent=0 // pred_check
    %p113 = pneg %p92
  $region19: #{masked_mse_loss.1} parent=0 // pred_check_branch
    %115 = sbr.rel (%p113) target = $region21
  $region20: #{masked_mse_loss.1} parent=0 // pred_region
    %s116 = smul.u32 %s91, 16
    %v117 = vlaneseq
    %v118 = vshrl.u32 %v117, 7
    %v119 = vadd.s32 %v118, 8
    %v120 = vstv %s116
    %v121 = vadd.s32 %v120, %v118
    %v122 = vadd.s32 %v120, %v119
    %vm123 = vcmp.lt.s32.totalorder %v121, 16
    %vm124 = vcmp.lt.s32.totalorder %v122, 16
    %vm125 = vmand %vm123, %vm89
    %vm126 = vmand %vm124, %vm90
    %v127 = vsub.f32 %v83, %v85
    %v128 = vsub.f32 %v84, %v86
    %v129 = vsel %vm125, %v127, 0.0
    %v130 = vsel %vm126, %v128, 0.0
    %v131 = vmul.f32 %v129, %v129
    %v132 = vmul.f32 %v130, %v130
    %v133 = vsel %vm125, 1, 0
    %v134 = vsel %vm126, 1, 0
    %v135 = vld [vmem:[#allocation2] sm:$0xff]
    %v136 = vadd.f32 %v131, %v132
    %v137 = vadd.f32 %v135, %v136
    %138 = vst [vmem:[#allocation2] sm:$0xff] %v137
    %v139 = vld [vmem:[#allocation3] sm:$0xff]
    %v140 = vadd.s32 %v133, %v134
    %v141 = vadd.s32 %v139, %v140
    %142 = vst [vmem:[#allocation3] sm:$0xff] %v141
  $region21: #{masked_mse_loss.1} parent=0 // pred_fallthru
    _
  // Predicated region
  $region22: #{masked_mse_loss.1} parent=0 // pred_check
    %p143 = pneg %p77
  $region23: #{masked_mse_loss.1} parent=0 // pred_check_branch
    %145 = sbr.rel (%p143) target = $region25
  $region24: #{masked_mse_loss.1} parent=0 // pred_region
    %v146 = vld [vmem:[#allocation2] sm:$0xff]
    %147 = vst [vmem:[%s2] sm:$0xff] %v146
    %v148 = vld [vmem:[#allocation3] sm:$0xff]
    %149 = vst [vmem:[%s3] sm:$0xff] %v148
  $region25: #{masked_mse_loss.1} parent=0 // pred_fallthru
    _
  // Predicated region
  $region26: #{masked_mse_loss.1} parent=0 // pred_check
    _
  $region27: #{masked_mse_loss.1} parent=0 // pred_check_branch
    %151 = sbr.rel (0) target = $region29
  $region28: #{masked_mse_loss.1} parent=0 // pred_region
    _
  $region29: #{masked_mse_loss.1} parent=0 // pred_fallthru
    _
  // Predicated region
  $region30: #{masked_mse_loss.1} parent=0 // pred_check
    _
  $region31: #{masked_mse_loss.1} parent=0 // pred_check_branch
    %153 = sbr.rel (0) target = $region33
  $region32: #{masked_mse_loss.1} parent=0 // pred_region
    _
  $region33: #{masked_mse_loss.1} parent=0 // pred_fallthru
    _
  // Predicated region
  $region34: #{masked_mse_loss.1} parent=0 // pred_check
    _
  $region35: #{masked_mse_loss.1} parent=0 // pred_check_branch
    %155 = sbr.rel (0) target = $region37
  $region36: #{masked_mse_loss.1} parent=0 // pred_region
    _
  $region37: #{masked_mse_loss.1} parent=0 // pred_fallthru
    _
  // Predicated region
  $region38: #{masked_mse_loss.1} parent=0 // pred_check
    _
  $region39: #{masked_mse_loss.1} parent=0 // pred_check_branch
    %157 = sbr.rel (0) target = $region41
  $region40: #{masked_mse_loss.1} parent=0 // pred_region
    _
  $region41: #{masked_mse_loss.1} parent=0 // pred_fallthru
    _

</llo_original>
